<compile_context>
chip_gen: v7x
topology: tpu7x:2x2x1
jax: 0.10.0
libtpu: 0.0.40
codegen_flags: <defaults>
</compile_context>

<pallas_src>
import jax
import jax.numpy as jnp
from jax.experimental import pallas as pl
from jax.experimental.pallas import tpu as pltpu

B, S, H = 2, 8, 512        # batch, sequence length, t5-small hidden size (fixed 512 by module)
P = 256                    # projection_dim (lane-dense multiple of 128)


def _pool_proj_kernel(x_ref, w_ref, b_ref, o_ref):
    # x_ref: (B, S, H) f32   w_ref: (H, P) bf16   b_ref: (1, P) f32   o_ref: (B, P) f32
    pooled = jnp.mean(x_ref[...], axis=1)                     # (B, H) f32 sublane reduce (XLU)
    y = jnp.dot(pooled.astype(jnp.bfloat16), w_ref[...],      # bf16 x bf16 on the MXU,
                preferred_element_type=jnp.float32)           # f32 accumulate -> (B, P)
    o_ref[...] = y + b_ref[...]                               # f32 bias add, full 256-lane store


def text_encoder_head(last_hidden, w, b):
    """Fused mean-pool + linear projection (single-step, whole problem in VMEM).

    last_hidden: [B, S, H] float32   (stand-in for T5 encoder last_hidden_state)
    w:           [P, H]    float32   (nn.Linear weight, PyTorch (out, in) convention)
    b:           [P]       float32
    returns:     [B, P]    float32
    """
    b_, s_, h_ = last_hidden.shape
    p_ = w.shape[0]
    w_t = w.T.astype(jnp.bfloat16)            # [H, P] bf16: halves HBM traffic, native MXU rate
    b2 = b.reshape(1, p_).astype(jnp.float32)  # [1, P] f32

    return pl.pallas_call(
        _pool_proj_kernel,
        out_shape=jax.ShapeDtypeStruct((b_, p_), jnp.float32),
        # No grid: single invocation, each array is one full VMEM-resident block.
        in_specs=[
            pl.BlockSpec(memory_space=pltpu.MemorySpace.VMEM),
            pl.BlockSpec(memory_space=pltpu.MemorySpace.VMEM),
            pl.BlockSpec(memory_space=pltpu.MemorySpace.VMEM),
        ],
        out_specs=pl.BlockSpec(memory_space=pltpu.MemorySpace.VMEM),
    )(last_hidden, w_t, b2)


if __name__ == "__main__":
    key = jax.random.PRNGKey(0)
    k_x, k_w, k_b = jax.random.split(key, 3)

    # Synthetic, deterministic stand-in for encoder_outputs.last_hidden_state.
    last_hidden = jax.random.normal(k_x, (B, S, H), dtype=jnp.float32)

    # nn.Linear(512, projection_dim) init (uniform in +/- 1/sqrt(fan_in)), deterministic.
    bound = 1.0 / jnp.sqrt(jnp.float32(H))
    w = jax.random.uniform(k_w, (P, H), dtype=jnp.float32, minval=-bound, maxval=bound)
    b = jax.random.uniform(k_b, (P,), dtype=jnp.float32, minval=-bound, maxval=bound)

    out = jax.block_until_ready(text_encoder_head(last_hidden, w, b))

    # Pure-JAX f32 reference of the module's visible forward math.
    pooled_ref = jnp.mean(last_hidden, axis=1)          # [B, H]
    ref = pooled_ref @ w.T + b                          # [B, P]

    assert out.shape == (B, P), out.shape
    # Tolerance loosened vs. the pure-f32 version because W / pooled feed the MXU in bf16.
    assert jnp.allclose(out, ref, atol=1e-2, rtol=1e-2), float(jnp.max(jnp.abs(out - ref)))

    print("KERNEL_OK")
</pallas_src>

<mosaic_0001>
module attributes {stable_mosaic.version = 11 : i64} {
  func.func @_pool_proj_kernel(%arg0: memref<2x8x512xf32, #tpu.memory_space<vmem>>, %arg1: memref<512x256xbf16, #tpu.memory_space<vmem>>, %arg2: memref<1x256xf32, #tpu.memory_space<vmem>>, %arg3: memref<2x256xf32, #tpu.memory_space<vmem>>) attributes {dimension_semantics = [], scalar_prefetch = 0 : i64, scratch_operands = 0 : i64, tpu.core_type = #tpu.core_type<tc>} {
    %c0 = arith.constant 0 : index
    %c0_0 = arith.constant 0 : index
    %c0_1 = arith.constant 0 : index
    %0 = vector.load %arg0[%c0, %c0_0, %c0_1] : memref<2x8x512xf32, #tpu.memory_space<vmem>>, vector<2x8x512xf32>
    %cst = arith.constant dense<0.000000e+00> : vector<2x512xf32>
    %1 = vector.multi_reduction <add>, %0, %cst [1] : vector<2x8x512xf32> to vector<2x512xf32>
    %cst_2 = arith.constant 8.000000e+00 : f32
    %2 = vector.broadcast %cst_2 : f32 to vector<2x512xf32>
    %3 = arith.divf %1, %2 : vector<2x512xf32>
    %4 = arith.truncf %3 : vector<2x512xf32> to vector<2x512xbf16>
    %c0_3 = arith.constant 0 : index
    %c0_4 = arith.constant 0 : index
    %5 = vector.load %arg1[%c0_3, %c0_4] : memref<512x256xbf16, #tpu.memory_space<vmem>>, vector<512x256xbf16>
    %cst_5 = arith.constant dense<0.000000e+00> : vector<2x256xf32>
    %6 = tpu.matmul %4, %5, %cst_5 {dimension_numbers = #tpu.dot_dimension_numbers<[1], [0], [0], [1], [0, 0, 1, 1], [], []>} : vector<2x512xbf16>, vector<512x256xbf16>, vector<2x256xf32> -> vector<2x256xf32>
    %c0_6 = arith.constant 0 : index
    %c0_7 = arith.constant 0 : index
    %7 = vector.load %arg2[%c0_6, %c0_7] : memref<1x256xf32, #tpu.memory_space<vmem>>, vector<1x256xf32>
    %8 = vector.broadcast %7 : vector<1x256xf32> to vector<2x256xf32>
    %9 = arith.addf %6, %8 : vector<2x256xf32>
    %c0_8 = arith.constant 0 : index
    %c0_9 = arith.constant 0 : index
    %10 = vector.load %arg3[%c0_8, %c0_9] : memref<2x256xf32, #tpu.memory_space<vmem>>, vector<2x256xf32>
    tpu.vector_store %arg3[%c0_8, %c0_9], %9 {strides = array<i32>} : memref<2x256xf32, #tpu.memory_space<vmem>>, vector<2x256xf32>,
    return
  }
}

</mosaic_0001>

<llo_original>
// kernel: tpu_custom_call.1
$region0: #{tpu_custom_call.1}
  #allocation0 [shape = 'u32[]', space=smem, size = 0x4, offset = 0x4, fixed_abs, tag = 'smem constant byte address 0x4 - core index']
  #allocation1 [shape = 'u32[144,128]{1,0:T(1,128)}', space=vmem, size = 0x12000, scoped, tag = 'internal scratch']
  %s0 = inlined_call_operand.hbm [shape: f32[2,8,512], index: 0, kind: input, shape index: {}]
  %s1 = inlined_call_operand.hbm [shape: bf16[512,256], index: 1, kind: input, shape index: {}]
  %s2 = inlined_call_operand.vmem [shape: f32[1,256], index: 2, kind: input, shape index: {}]
  %s3 = inlined_call_operand.hbm [shape: f32[2,256], index: 3, kind: output, shape index: {}]
  %s4 = sld [smem:[#allocation0]]
  $region30: #{tpu_custom_call.1} parent=0
    _
  %s6 = ssub.s32 1, %s4
  %s7 = scalar_select 0, %s6, %s4
  $region1: #{tpu_custom_call.1} parent=0
    #allocation2 [shape = 'u8[32768]{0}', space=vmem, size = 0x8000, scoped, tag = 'input window, operand 0, single buffered']
    #allocation3 [shape = 's32[1]{0}', space=sflag, size = 0x4, scoped, tag = 'scoped memory for tpu_custom_call.1']
    #allocation4 [shape = 's32[1]{0}', space=sflag, size = 0x4, scoped, tag = 'scoped memory for tpu_custom_call.1']
    #allocation5 [shape = 'u8[262144]{0}', space=vmem, size = 0x40000, scoped, tag = 'input window, operand 1, single buffered']
    #allocation6 [shape = 's32[1]{0}', space=sflag, size = 0x4, scoped, tag = 'scoped memory for tpu_custom_call.1']
    #allocation7 [shape = 'u8[2048]{0}', space=vmem, size = 0x800, scoped, tag = 'output window, operand 0, single buffered']
    %8 = vsyncpa [#allocation3], 0
    %9 = vsyncpa [#allocation6], 0
    %10 = vsyncpa [#allocation4], 0
    // Predicated region
    $region2: #{tpu_custom_call.1} parent=1 // pred_check
      _
    $region3: #{tpu_custom_call.1} parent=1 // pred_check_branch
      %12 = sbr.rel (0) target = $region5
    $region4: #{tpu_custom_call.1} parent=1 // pred_region
      %s14 = ssub.s32 1024, 1024
      %15 = vsyncadd [#allocation3], %s14
      %s16 = sshll.u32 [#allocation2], 4
      %s17 = int_to_ptr.vmem [resolvable:$true] %s16
      %22 = dma.hbm_to_vmem [thread:$0]  %s0, 1024, %s17, [#allocation3], 512, 512, 32
    $region5: #{tpu_custom_call.1} parent=1 // pred_fallthru
      _
    // Predicated region
    $region6: #{tpu_custom_call.1} parent=1 // pred_check
      _
    $region7: #{tpu_custom_call.1} parent=1 // pred_check_branch
      %24 = sbr.rel (0) target = $region9
    $region8: #{tpu_custom_call.1} parent=1 // pred_region
      %s26 = ssub.s32 8192, 8192
      %27 = vsyncadd [#allocation6], %s26
      %s28 = sshll.u32 [#allocation5], 4
      %s29 = int_to_ptr.vmem [resolvable:$true] %s28
      %34 = dma.hbm_to_vmem [thread:$0]  %s1, 8192, %s29, [#allocation6], 128, 128, 8
    $region9: #{tpu_custom_call.1} parent=1 // pred_fallthru
      _
    // Predicated region
    $region10: #{tpu_custom_call.1} parent=1 // pred_check
      _
    $region11: #{tpu_custom_call.1} parent=1 // pred_check_branch
      %36 = sbr.rel (0) target = $region13
    $region12: #{tpu_custom_call.1} parent=1 // pred_region
      _
    $region13: #{tpu_custom_call.1} parent=1 // pred_fallthru
      _
    // Predicated region
    $region14: #{tpu_custom_call.1} parent=1 // pred_check
      _
    $region15: #{tpu_custom_call.1} parent=1 // pred_check_branch
      %38 = sbr.rel (0) target = $region17
    $region16: #{tpu_custom_call.1} parent=1 // pred_region
      %39 = dma.done [#allocation3], 1024
    $region17: #{tpu_custom_call.1} parent=1 // pred_fallthru
      _
    // Predicated region
    $region18: #{tpu_custom_call.1} parent=1 // pred_check
      _
    $region19: #{tpu_custom_call.1} parent=1 // pred_check_branch
      %41 = sbr.rel (0) target = $region21
    $region20: #{tpu_custom_call.1} parent=1 // pred_region
      %42 = dma.done [#allocation6], 8192
    $region21: #{tpu_custom_call.1} parent=1 // pred_fallthru
      _
    %v43 = vld [vmem:[#allocation2] sm:$0xff]
    %v44 = vld [vmem:[#allocation2 + $0x8] sm:$0xff]
    %v45 = vld [vmem:[#allocation2 + $0x10] sm:$0xff]
    %v46 = vld [vmem:[#allocation2 + $0x18] sm:$0xff]
    %v47 = vld [vmem:[#allocation2 + $0x20] sm:$0xff]
    %v48 = vld [vmem:[#allocation2 + $0x28] sm:$0xff]
    %v49 = vld [vmem:[#allocation2 + $0x30] sm:$0xff]
    %v50 = vld [vmem:[#allocation2 + $0x38] sm:$0xff]
    %v51 = vrot.slane %v43, 4
    %v52 = vadd.f32 %v43, %v51
    %v53 = vrot.slane %v52, 2
    %v54 = vadd.f32 %v52, %v53
    %v55 = vrot.slane %v54, 1
    %v56 = vadd.f32 %v54, %v55
    %v57 = vrot.slane %v44, 4
    %v58 = vadd.f32 %v44, %v57
    %v59 = vrot.slane %v58, 2
    %v60 = vadd.f32 %v58, %v59
    %v61 = vrot.slane %v60, 1
    %v62 = vadd.f32 %v60, %v61
    %v63 = vrot.slane %v45, 4
    %v64 = vadd.f32 %v45, %v63
    %v65 = vrot.slane %v64, 2
    %v66 = vadd.f32 %v64, %v65
    %v67 = vrot.slane %v66, 1
    %v68 = vadd.f32 %v66, %v67
    %v69 = vrot.slane %v46, 4
    %v70 = vadd.f32 %v46, %v69
    %v71 = vrot.slane %v70, 2
    %v72 = vadd.f32 %v70, %v71
    %v73 = vrot.slane %v72, 1
    %v74 = vadd.f32 %v72, %v73
    %v75 = vrot.slane %v47, 4
    %v76 = vadd.f32 %v47, %v75
    %v77 = vrot.slane %v76, 2
    %v78 = vadd.f32 %v76, %v77
    %v79 = vrot.slane %v78, 1
    %v80 = vadd.f32 %v78, %v79
    %v81 = vrot.slane %v48, 4
    %v82 = vadd.f32 %v48, %v81
    %v83 = vrot.slane %v82, 2
    %v84 = vadd.f32 %v82, %v83
    %v85 = vrot.slane %v84, 1
    %v86 = vadd.f32 %v84, %v85
    %v87 = vrot.slane %v49, 4
    %v88 = vadd.f32 %v49, %v87
    %v89 = vrot.slane %v88, 2
    %v90 = vadd.f32 %v88, %v89
    %v91 = vrot.slane %v90, 1
    %v92 = vadd.f32 %v90, %v91
    %v93 = vrot.slane %v50, 4
    %v94 = vadd.f32 %v50, %v93
    %v95 = vrot.slane %v94, 2
    %v96 = vadd.f32 %v94, %v95
    %v97 = vrot.slane %v96, 1
    %v98 = vadd.f32 %v96, %v97
    %v99 = vrcp.pop 8.0
    %v100 = vmul.f32 %v56, %v99
    %v101 = vmul.f32 %v62, %v99
    %v102 = vmul.f32 %v68, %v99
    %v103 = vmul.f32 %v74, %v99
    %v104 = vmul.f32 %v80, %v99
    %v105 = vmul.f32 %v86, %v99
    %v106 = vmul.f32 %v92, %v99
    %v107 = vmul.f32 %v98, %v99
    %v108 = vpack.c.bf16 %v100, %v100
    %v109 = vpack.c.bf16 %v101, %v101
    %v110 = vpack.c.bf16 %v102, %v102
    %v111 = vpack.c.bf16 %v103, %v103
    %v112 = vpack.c.bf16 %v104, %v104
    %v113 = vpack.c.bf16 %v105, %v105
    %v114 = vpack.c.bf16 %v106, %v106
    %v115 = vpack.c.bf16 %v107, %v107
    %v116 = vld [vmem:[#allocation5] sm:$0xff]
    %v117 = vld [vmem:[#allocation5 + $0x8] sm:$0xff]
    %v118 = vld [vmem:[#allocation5 + $0x10] sm:$0xff]
    %v119 = vld [vmem:[#allocation5 + $0x18] sm:$0xff]
    %v120 = vld [vmem:[#allocation5 + $0x20] sm:$0xff]
    %v121 = vld [vmem:[#allocation5 + $0x28] sm:$0xff]
    %v122 = vld [vmem:[#allocation5 + $0x30] sm:$0xff]
    %v123 = vld [vmem:[#allocation5 + $0x38] sm:$0xff]
    %v124 = vld [vmem:[#allocation5 + $0x40] sm:$0xff]
    %v125 = vld [vmem:[#allocation5 + $0x48] sm:$0xff]
    %v126 = vld [vmem:[#allocation5 + $0x50] sm:$0xff]
    %v127 = vld [vmem:[#allocation5 + $0x58] sm:$0xff]
    %v128 = vld [vmem:[#allocation5 + $0x60] sm:$0xff]
    %v129 = vld [vmem:[#allocation5 + $0x68] sm:$0xff]
    %v130 = vld [vmem:[#allocation5 + $0x70] sm:$0xff]
    %v131 = vld [vmem:[#allocation5 + $0x78] sm:$0xff]
    %v132 = vld [vmem:[#allocation5 + $0x80] sm:$0xff]
    %v133 = vld [vmem:[#allocation5 + $0x88] sm:$0xff]
    %v134 = vld [vmem:[#allocation5 + $0x90] sm:$0xff]
    %v135 = vld [vmem:[#allocation5 + $0x98] sm:$0xff]
    %v136 = vld [vmem:[#allocation5 + $0xa0] sm:$0xff]
    %v137 = vld [vmem:[#allocation5 + $0xa8] sm:$0xff]
    %v138 = vld [vmem:[#allocation5 + $0xb0] sm:$0xff]
    %v139 = vld [vmem:[#allocation5 + $0xb8] sm:$0xff]
    %v140 = vld [vmem:[#allocation5 + $0xc0] sm:$0xff]
    %v141 = vld [vmem:[#allocation5 + $0xc8] sm:$0xff]
    %v142 = vld [vmem:[#allocation5 + $0xd0] sm:$0xff]
    %v143 = vld [vmem:[#allocation5 + $0xd8] sm:$0xff]
    %v144 = vld [vmem:[#allocation5 + $0xe0] sm:$0xff]
    %v145 = vld [vmem:[#allocation5 + $0xe8] sm:$0xff]
    %v146 = vld [vmem:[#allocation5 + $0xf0] sm:$0xff]
    %v147 = vld [vmem:[#allocation5 + $0xf8] sm:$0xff]
    %v148 = vld [vmem:[#allocation5 + $0x100] sm:$0xff]
    %v149 = vld [vmem:[#allocation5 + $0x108] sm:$0xff]
    %v150 = vld [vmem:[#allocation5 + $0x110] sm:$0xff]
    %v151 = vld [vmem:[#allocation5 + $0x118] sm:$0xff]
    %v152 = vld [vmem:[#allocation5 + $0x120] sm:$0xff]
    %v153 = vld [vmem:[#allocation5 + $0x128] sm:$0xff]
    %v154 = vld [vmem:[#allocation5 + $0x130] sm:$0xff]
    %v155 = vld [vmem:[#allocation5 + $0x138] sm:$0xff]
    %v156 = vld [vmem:[#allocation5 + $0x140] sm:$0xff]
    %v157 = vld [vmem:[#allocation5 + $0x148] sm:$0xff]
    %v158 = vld [vmem:[#allocation5 + $0x150] sm:$0xff]
    %v159 = vld [vmem:[#allocation5 + $0x158] sm:$0xff]
    %v160 = vld [vmem:[#allocation5 + $0x160] sm:$0xff]
    %v161 = vld [vmem:[#allocation5 + $0x168] sm:$0xff]
    %v162 = vld [vmem:[#allocation5 + $0x170] sm:$0xff]
    %v163 = vld [vmem:[#allocation5 + $0x178] sm:$0xff]
    %v164 = vld [vmem:[#allocation5 + $0x180] sm:$0xff]
    %v165 = vld [vmem:[#allocation5 + $0x188] sm:$0xff]
    %v166 = vld [vmem:[#allocation5 + $0x190] sm:$0xff]
    %v167 = vld [vmem:[#allocation5 + $0x198] sm:$0xff]
    %v168 = vld [vmem:[#allocation5 + $0x1a0] sm:$0xff]
    %v169 = vld [vmem:[#allocation5 + $0x1a8] sm:$0xff]
    %v170 = vld [vmem:[#allocation5 + $0x1b0] sm:$0xff]
    %v171 = vld [vmem:[#allocation5 + $0x1b8] sm:$0xff]
    %v172 = vld [vmem:[#allocation5 + $0x1c0] sm:$0xff]
    %v173 = vld [vmem:[#allocation5 + $0x1c8] sm:$0xff]
    %v174 = vld [vmem:[#allocation5 + $0x1d0] sm:$0xff]
    %v175 = vld [vmem:[#allocation5 + $0x1d8] sm:$0xff]
    %v176 = vld [vmem:[#allocation5 + $0x1e0] sm:$0xff]
    %v177 = vld [vmem:[#allocation5 + $0x1e8] sm:$0xff]
    %v178 = vld [vmem:[#allocation5 + $0x1f0] sm:$0xff]
    %v179 = vld [vmem:[#allocation5 + $0x1f8] sm:$0xff]
    %v180 = vld [vmem:[%s2] sm:$0x3]
    %v182 = vlaneseq
    %v183 = vshrl.u32 %v182, 7
    %v184 = vsub.s32 0, %v183
    %v185 = vrot.slane %v180, %v184
    %v186 = vlaneseq
    %v187 = vshrl.u32 %v186, 7
    %v188 = vsub.s32 1, %v187
    %v189 = vrot.slane %v180, %v188
    %v200 = vunpack.c.l.b16 %v108
    %v201 = vunpack.c.l.b16 %v109
    %v202 = vunpack.c.l.b16 %v110
    %v203 = vunpack.c.l.b16 %v111
    %v204 = vunpack.c.l.b16 %v112
    %v205 = vunpack.c.l.b16 %v113
    %v206 = vunpack.c.l.b16 %v114
    %v207 = vunpack.c.l.b16 %v115
    %vm208 = vcmask 1041409
    %v209 = vsel %vm208, %v204, %v200
    %v210 = vsel %vm208, %v205, %v201
    %v211 = vsel %vm208, %v206, %v202
    %v212 = vsel %vm208, %v207, %v203
    %v213 = vpack.c.b16 %v209, %v209
    %v214 = vpack.c.b16 %v210, %v210
    %v215 = vpack.c.b16 %v211, %v211
    %v216 = vpack.c.b16 %v212, %v212
    %v285 = vunpack.c.l.b16 %v116
    %v286 = vunpack.c.h.b16 %v116
    %v287 = vunpack.c.l.b16 %v117
    %v288 = vunpack.c.h.b16 %v117
    %v289 = vunpack.c.l.b16 %v118
    %v290 = vunpack.c.h.b16 %v118
    %v291 = vunpack.c.l.b16 %v119
    %v292 = vunpack.c.h.b16 %v119
    %v293 = vunpack.c.l.b16 %v120
    %v294 = vunpack.c.h.b16 %v120
    %v295 = vunpack.c.l.b16 %v121
    %v296 = vunpack.c.h.b16 %v121
    %v297 = vunpack.c.l.b16 %v122
    %v298 = vunpack.c.h.b16 %v122
    %v299 = vunpack.c.l.b16 %v123
    %v300 = vunpack.c.h.b16 %v123
    %v301 = vunpack.c.l.b16 %v124
    %v302 = vunpack.c.h.b16 %v124
    %v303 = vunpack.c.l.b16 %v125
    %v304 = vunpack.c.h.b16 %v125
    %v305 = vunpack.c.l.b16 %v126
    %v306 = vunpack.c.h.b16 %v126
    %v307 = vunpack.c.l.b16 %v127
    %v308 = vunpack.c.h.b16 %v127
    %v309 = vunpack.c.l.b16 %v128
    %v310 = vunpack.c.h.b16 %v128
    %v311 = vunpack.c.l.b16 %v129
    %v312 = vunpack.c.h.b16 %v129
    %v313 = vunpack.c.l.b16 %v130
    %v314 = vunpack.c.h.b16 %v130
    %v315 = vunpack.c.l.b16 %v131
    %v316 = vunpack.c.h.b16 %v131
    %v317 = vunpack.c.l.b16 %v132
    %v318 = vunpack.c.h.b16 %v132
    %v319 = vunpack.c.l.b16 %v133
    %v320 = vunpack.c.h.b16 %v133
    %v321 = vunpack.c.l.b16 %v134
    %v322 = vunpack.c.h.b16 %v134
    %v323 = vunpack.c.l.b16 %v135
    %v324 = vunpack.c.h.b16 %v135
    %v325 = vunpack.c.l.b16 %v136
    %v326 = vunpack.c.h.b16 %v136
    %v327 = vunpack.c.l.b16 %v137
    %v328 = vunpack.c.h.b16 %v137
    %v329 = vunpack.c.l.b16 %v138
    %v330 = vunpack.c.h.b16 %v138
    %v331 = vunpack.c.l.b16 %v139
    %v332 = vunpack.c.h.b16 %v139
    %v333 = vunpack.c.l.b16 %v140
    %v334 = vunpack.c.h.b16 %v140
    %v335 = vunpack.c.l.b16 %v141
    %v336 = vunpack.c.h.b16 %v141
    %v337 = vunpack.c.l.b16 %v142
    %v338 = vunpack.c.h.b16 %v142
    %v339 = vunpack.c.l.b16 %v143
    %v340 = vunpack.c.h.b16 %v143
    %v341 = vunpack.c.l.b16 %v144
    %v342 = vunpack.c.h.b16 %v144
    %v343 = vunpack.c.l.b16 %v145
    %v344 = vunpack.c.h.b16 %v145
    %v345 = vunpack.c.l.b16 %v146
    %v346 = vunpack.c.h.b16 %v146
    %v347 = vunpack.c.l.b16 %v147
    %v348 = vunpack.c.h.b16 %v147
    %v349 = vunpack.c.l.b16 %v148
    %v350 = vunpack.c.h.b16 %v148
    %v351 = vunpack.c.l.b16 %v149
    %v352 = vunpack.c.h.b16 %v149
    %v353 = vunpack.c.l.b16 %v150
    %v354 = vunpack.c.h.b16 %v150
    %v355 = vunpack.c.l.b16 %v151
    %v356 = vunpack.c.h.b16 %v151
    %v357 = vunpack.c.l.b16 %v152
    %v358 = vunpack.c.h.b16 %v152
    %v359 = vunpack.c.l.b16 %v153
    %v360 = vunpack.c.h.b16 %v153
    %v361 = vunpack.c.l.b16 %v154
    %v362 = vunpack.c.h.b16 %v154
    %v363 = vunpack.c.l.b16 %v155
    %v364 = vunpack.c.h.b16 %v155
    %v365 = vunpack.c.l.b16 %v156
    %v366 = vunpack.c.h.b16 %v156
    %v367 = vunpack.c.l.b16 %v157
    %v368 = vunpack.c.h.b16 %v157
    %v369 = vunpack.c.l.b16 %v158
    %v370 = vunpack.c.h.b16 %v158
    %v371 = vunpack.c.l.b16 %v159
    %v372 = vunpack.c.h.b16 %v159
    %v373 = vunpack.c.l.b16 %v160
    %v374 = vunpack.c.h.b16 %v160
    %v375 = vunpack.c.l.b16 %v161
    %v376 = vunpack.c.h.b16 %v161
    %v377 = vunpack.c.l.b16 %v162
    %v378 = vunpack.c.h.b16 %v162
    %v379 = vunpack.c.l.b16 %v163
    %v380 = vunpack.c.h.b16 %v163
    %v381 = vunpack.c.l.b16 %v164
    %v382 = vunpack.c.h.b16 %v164
    %v383 = vunpack.c.l.b16 %v165
    %v384 = vunpack.c.h.b16 %v165
    %v385 = vunpack.c.l.b16 %v166
    %v386 = vunpack.c.h.b16 %v166
    %v387 = vunpack.c.l.b16 %v167
    %v388 = vunpack.c.h.b16 %v167
    %v389 = vunpack.c.l.b16 %v168
    %v390 = vunpack.c.h.b16 %v168
    %v391 = vunpack.c.l.b16 %v169
    %v392 = vunpack.c.h.b16 %v169
    %v393 = vunpack.c.l.b16 %v170
    %v394 = vunpack.c.h.b16 %v170
    %v395 = vunpack.c.l.b16 %v171
    %v396 = vunpack.c.h.b16 %v171
    %v397 = vunpack.c.l.b16 %v172
    %v398 = vunpack.c.h.b16 %v172
    %v399 = vunpack.c.l.b16 %v173
    %v400 = vunpack.c.h.b16 %v173
    %v401 = vunpack.c.l.b16 %v174
    %v402 = vunpack.c.h.b16 %v174
    %v403 = vunpack.c.l.b16 %v175
    %v404 = vunpack.c.h.b16 %v175
    %v405 = vunpack.c.l.b16 %v176
    %v406 = vunpack.c.h.b16 %v176
    %v407 = vunpack.c.l.b16 %v177
    %v408 = vunpack.c.h.b16 %v177
    %v409 = vunpack.c.l.b16 %v178
    %v410 = vunpack.c.h.b16 %v178
    %v411 = vunpack.c.l.b16 %v179
    %v412 = vunpack.c.h.b16 %v179
    %v413 = vpack.c.b16 %v287, %v285
    %v414 = vpack.c.b16 %v288, %v286
    %v415 = vpack.c.b16 %v291, %v289
    %v416 = vpack.c.b16 %v292, %v290
    %v417 = vpack.c.b16 %v295, %v293
    %v418 = vpack.c.b16 %v296, %v294
    %v419 = vpack.c.b16 %v299, %v297
    %v420 = vpack.c.b16 %v300, %v298
    %v421 = vpack.c.b16 %v303, %v301
    %v422 = vpack.c.b16 %v304, %v302
    %v423 = vpack.c.b16 %v307, %v305
    %v424 = vpack.c.b16 %v308, %v306
    %v425 = vpack.c.b16 %v311, %v309
    %v426 = vpack.c.b16 %v312, %v310
    %v427 = vpack.c.b16 %v315, %v313
    %v428 = vpack.c.b16 %v316, %v314
    %v429 = vpack.c.b16 %v319, %v317
    %v430 = vpack.c.b16 %v320, %v318
    %v431 = vpack.c.b16 %v323, %v321
    %v432 = vpack.c.b16 %v324, %v322
    %v433 = vpack.c.b16 %v327, %v325
    %v434 = vpack.c.b16 %v328, %v326
    %v435 = vpack.c.b16 %v331, %v329
    %v436 = vpack.c.b16 %v332, %v330
    %v437 = vpack.c.b16 %v335, %v333
    %v438 = vpack.c.b16 %v336, %v334
    %v439 = vpack.c.b16 %v339, %v337
    %v440 = vpack.c.b16 %v340, %v338
    %v441 = vpack.c.b16 %v343, %v341
    %v442 = vpack.c.b16 %v344, %v342
    %v443 = vpack.c.b16 %v347, %v345
    %v444 = vpack.c.b16 %v348, %v346
    %v445 = vpack.c.b16 %v351, %v349
    %v446 = vpack.c.b16 %v352, %v350
    %v447 = vpack.c.b16 %v355, %v353
    %v448 = vpack.c.b16 %v356, %v354
    %v449 = vpack.c.b16 %v359, %v357
    %v450 = vpack.c.b16 %v360, %v358
    %v451 = vpack.c.b16 %v363, %v361
    %v452 = vpack.c.b16 %v364, %v362
    %v453 = vpack.c.b16 %v367, %v365
    %v454 = vpack.c.b16 %v368, %v366
    %v455 = vpack.c.b16 %v371, %v369
    %v456 = vpack.c.b16 %v372, %v370
    %v457 = vpack.c.b16 %v375, %v373
    %v458 = vpack.c.b16 %v376, %v374
    %v459 = vpack.c.b16 %v379, %v377
    %v460 = vpack.c.b16 %v380, %v378
    %v461 = vpack.c.b16 %v383, %v381
    %v462 = vpack.c.b16 %v384, %v382
    %v463 = vpack.c.b16 %v387, %v385
    %v464 = vpack.c.b16 %v388, %v386
    %v465 = vpack.c.b16 %v391, %v389
    %v466 = vpack.c.b16 %v392, %v390
    %v467 = vpack.c.b16 %v395, %v393
    %v468 = vpack.c.b16 %v396, %v394
    %v469 = vpack.c.b16 %v399, %v397
    %v470 = vpack.c.b16 %v400, %v398
    %v471 = vpack.c.b16 %v403, %v401
    %v472 = vpack.c.b16 %v404, %v402
    %v473 = vpack.c.b16 %v407, %v405
    %v474 = vpack.c.b16 %v408, %v406
    %v475 = vpack.c.b16 %v411, %v409
    %v476 = vpack.c.b16 %v412, %v410
    %541 = vmatprep.subr.bf16.mxu0 %v414
    %542 = vmatpush1.bf16.msra.mxu0 %v413
    %543 = vmatprep.subr.bf16.mxu0 %v416
    %544 = vmatpush1.bf16.msra.mxu0 %v415
    %545 = vmatprep.subr.bf16.mxu0 %v418
    %546 = vmatpush1.bf16.msra.mxu0 %v417
    %547 = vmatprep.subr.bf16.mxu0 %v420
    %548 = vmatpush1.bf16.msra.mxu0 %v419
    %549 = vmatprep.subr.bf16.mxu0 %v422
    %550 = vmatpush1.bf16.msra.mxu0 %v421
    %551 = vmatprep.subr.bf16.mxu0 %v424
    %552 = vmatpush1.bf16.msra.mxu0 %v423
    %553 = vmatprep.subr.bf16.mxu0 %v426
    %554 = vmatpush1.bf16.msra.mxu0 %v425
    %555 = vmatprep.subr.bf16.mxu0 %v428
    %556 = vmatpush1.bf16.msra.mxu0 %v427
    %557 = vmatprep.subr.bf16.mxu0 %v430
    %558 = vmatpush1.bf16.msra.mxu0 %v429
    %559 = vmatprep.subr.bf16.mxu0 %v432
    %560 = vmatpush1.bf16.msra.mxu0 %v431
    %561 = vmatprep.subr.bf16.mxu0 %v434
    %562 = vmatpush1.bf16.msra.mxu0 %v433
    %563 = vmatprep.subr.bf16.mxu0 %v436
    %564 = vmatpush1.bf16.msra.mxu0 %v435
    %565 = vmatprep.subr.bf16.mxu0 %v438
    %566 = vmatpush1.bf16.msra.mxu0 %v437
    %567 = vmatprep.subr.bf16.mxu0 %v440
    %568 = vmatpush1.bf16.msra.mxu0 %v439
    %569 = vmatprep.subr.bf16.mxu0 %v442
    %570 = vmatpush1.bf16.msra.mxu0 %v441
    %571 = vmatprep.subr.bf16.mxu0 %v444
    %572 = vmatpush1.bf16.msra.mxu0 %v443
    %573 = vmatprep.mubr.bf16.mxu0 %v214
    %574 = vmatmul.mubr.bf16.gmra.mrb[0].mxu0 %v213
    %v575 = vpop.f32.mrb[0].mxu0
    %v576 = vadd.f32 %v185, %v575
    %v577 = vpop.f32.mrb[0].mxu0
    %v578 = vadd.f32 %v189, %v577
    %v579 = vpop.f32.mrb[0].mxu0
    %v580 = vpop.f32.mrb[0].mxu0
    %581 = vdwg.mxu0
    %582 = vmatprep.subr.bf16.mxu0 %v446
    %583 = vmatpush1.bf16.msra.mxu0 %v445
    %584 = vmatprep.subr.bf16.mxu0 %v448
    %585 = vmatpush1.bf16.msra.mxu0 %v447
    %586 = vmatprep.subr.bf16.mxu0 %v450
    %587 = vmatpush1.bf16.msra.mxu0 %v449
    %588 = vmatprep.subr.bf16.mxu0 %v452
    %589 = vmatpush1.bf16.msra.mxu0 %v451
    %590 = vmatprep.subr.bf16.mxu0 %v454
    %591 = vmatpush1.bf16.msra.mxu0 %v453
    %592 = vmatprep.subr.bf16.mxu0 %v456
    %593 = vmatpush1.bf16.msra.mxu0 %v455
    %594 = vmatprep.subr.bf16.mxu0 %v458
    %595 = vmatpush1.bf16.msra.mxu0 %v457
    %596 = vmatprep.subr.bf16.mxu0 %v460
    %597 = vmatpush1.bf16.msra.mxu0 %v459
    %598 = vmatprep.subr.bf16.mxu0 %v462
    %599 = vmatpush1.bf16.msra.mxu0 %v461
    %600 = vmatprep.subr.bf16.mxu0 %v464
    %601 = vmatpush1.bf16.msra.mxu0 %v463
    %602 = vmatprep.subr.bf16.mxu0 %v466
    %603 = vmatpush1.bf16.msra.mxu0 %v465
    %604 = vmatprep.subr.bf16.mxu0 %v468
    %605 = vmatpush1.bf16.msra.mxu0 %v467
    %606 = vmatprep.subr.bf16.mxu0 %v470
    %607 = vmatpush1.bf16.msra.mxu0 %v469
    %608 = vmatprep.subr.bf16.mxu0 %v472
    %609 = vmatpush1.bf16.msra.mxu0 %v471
    %610 = vmatprep.subr.bf16.mxu0 %v474
    %611 = vmatpush1.bf16.msra.mxu0 %v473
    %612 = vmatprep.subr.bf16.mxu0 %v476
    %613 = vmatpush1.bf16.msra.mxu0 %v475
    %614 = vmatprep.mubr.bf16.mxu0 %v216
    %615 = vmatmul.mubr.bf16.gmra.mrb[0].mxu0 %v215
    %v616 = vpop.f32.mrb[0].mxu0
    %v617 = vadd.f32 %v576, %v616
    %v618 = vpop.f32.mrb[0].mxu0
    %v619 = vadd.f32 %v578, %v618
    %v620 = vpop.f32.mrb[0].mxu0
    %v621 = vpop.f32.mrb[0].mxu0
    %622 = vdwg.mxu0
    %v625 = vcombine.low %v617, %v619
    %v627 = vunpack.c.l.s4 1983009808
    %v628 = vunpack.c.0.s8 %v627
    %v629 = vlaneseq
    %v630 = vshrl.u32 %v629, 7
    %v631 = vsub.s32 %v628, %v630
    %v632 = vrot.slane %v625, %v631
    %634 = vst [vmem:[#allocation7] sm:$0xf] %v632
    // Predicated region
    $region22: #{tpu_custom_call.1} parent=1 // pred_check
      _
    $region23: #{tpu_custom_call.1} parent=1 // pred_check_branch
      %636 = sbr.rel (0) target = $region25
    $region24: #{tpu_custom_call.1} parent=1 // pred_region
      %s638 = ssub.s32 64, 64
      %639 = vsyncadd [#allocation4], %s638
      %s641 = sshll.u32 [#allocation7], 4
      %s642 = int_to_ptr.vmem [resolvable:$true] %s641
      %644 = dma.vmem_to_hbm [thread:$0]  %s642, 64, %s3, [#allocation4]
    $region25: #{tpu_custom_call.1} parent=1 // pred_fallthru
      _
    // Predicated region
    $region26: #{tpu_custom_call.1} parent=1 // pred_check
      _
    $region27: #{tpu_custom_call.1} parent=1 // pred_check_branch
      %646 = sbr.rel (0) target = $region29
    $region28: #{tpu_custom_call.1} parent=1 // pred_region
      %647 = dma.done [#allocation4], 64
    $region29: #{tpu_custom_call.1} parent=1 // pred_fallthru
      _
    %648 = vsyncpa [#allocation3], 1
    %649 = vsyncpa [#allocation6], 1
    %650 = vsyncpa [#allocation4], 1

</llo_original>
